<compile_context>
chip_gen: v7x
topology: tpu7x:2x2x1
jax: 0.10.0
libtpu: 0.0.40
codegen_flags: <defaults>
</compile_context>

<pallas_src>
import functools

import jax
import jax.numpy as jnp
from jax.experimental import pallas as pl
from jax.experimental.pallas import tpu as pltpu


# ----------------------------------------------------------------------------
# Fused kernel: backbone Linear+ReLU (hooked representation) + projector MLP
# ----------------------------------------------------------------------------
def _netwrapper_kernel(x_ref, w0_ref, w1_ref, w2_ref, vecs_ref,
                       rep_ref, proj_ref, *, batch, b_pad, feat, hidden,
                       proj_p):
    k = pl.program_id(0)

    # rep_ref is the resident f32 accumulator for the K-tiled backbone matmul
    # (output BlockSpec returns the same block for every k -> stays in VMEM).
    # Initialize it with the broadcast backbone bias so the epilogue needs no
    # separate bias add.
    @pl.when(k == 0)
    def _():
        rep_ref[...] = jnp.broadcast_to(vecs_ref[0:1, :feat], rep_ref.shape)

    # Stream one K tile of w0 (bf16) and accumulate on the MXU in f32.
    # x is already bf16 (cast once in the wrapper), no per-step convert here.
    rep_ref[...] += jnp.dot(x_ref[...], w0_ref[...],
                            preferred_element_type=jnp.float32)

    # Epilogue on the final K step: ReLU (this is the flattened hook output ==
    # representation), then the full projector MLP, all while still in VMEM.
    @pl.when(k == pl.num_programs(0) - 1)
    def _():
        rep = jnp.maximum(rep_ref[...], 0.0)                      # (Bp, FEAT)
        rep_ref[...] = rep

        b1 = vecs_ref[1:2, :hidden]
        gamma = vecs_ref[2:3, :hidden]
        beta = vecs_ref[3:4, :hidden]
        b2 = vecs_ref[4:5, :proj_p]

        # projector Linear(FEAT, H)
        h = jnp.dot(rep.astype(jnp.bfloat16), w1_ref[...],
                    preferred_element_type=jnp.float32) + b1

        # BatchNorm1d in training mode: biased batch statistics over the valid
        # batch rows. The mask is skipped statically when the batch needed no
        # padding.
        inv_b = 1.0 / float(batch)
        if b_pad == batch:
            mean = jnp.sum(h, axis=0, keepdims=True) * inv_b      # (1, H)
            centered = h - mean
            var = jnp.sum(centered * centered, axis=0, keepdims=True) * inv_b
        else:
            row = jax.lax.broadcasted_iota(jnp.int32, h.shape, 0)
            valid = (row < batch).astype(jnp.float32)
            mean = jnp.sum(h * valid, axis=0, keepdims=True) * inv_b
            centered = (h - mean) * valid
            var = jnp.sum(centered * centered, axis=0, keepdims=True) * inv_b

        # Fold gamma into the rsqrt scale (one fewer (Bp, H) multiply).
        scale = gamma * jax.lax.rsqrt(var + 1e-5)                 # EUP rsqrt
        hn = jnp.maximum((h - mean) * scale + beta, 0.0)          # ReLU

        # projector Linear(H, PROJ_padded) -- lane-dense (128-wide) store.
        proj_ref[...] = jnp.dot(hn.astype(jnp.bfloat16), w2_ref[...],
                                preferred_element_type=jnp.float32) + b2


def _fused_forward(x_p, w0, w1, w2, vecs, *, batch, tk):
    bp, d_pad = x_p.shape
    feat = w0.shape[1]
    hidden = w1.shape[1]
    proj_p = w2.shape[1]
    wmax = vecs.shape[1]
    ksteps = d_pad // tk

    kernel = functools.partial(_netwrapper_kernel, batch=batch, b_pad=bp,
                               feat=feat, hidden=hidden, proj_p=proj_p)

    # Advisory scheduler hint: padded batch, bf16 bytes for x / weights.
    flops = 2 * bp * (d_pad * feat + feat * hidden + hidden * proj_p)
    bytes_accessed = (x_p.size * 2 + w0.size * 2 + w1.size * 2 + w2.size * 2
                      + vecs.size * 4 + bp * (feat + proj_p) * 4)

    # VMEM budget derived from actual buffer sizes (double-buffer factor on the
    # streamed blocks) + headroom, capped well below v7x's 64 MiB physical VMEM.
    vmem_bytes = (
        2 * (bp * tk * 2)            # x tile   (bf16, double-buffered)
        + 2 * (tk * feat * 2)        # w0 tile  (bf16, double-buffered)
        + 2 * (feat * hidden * 2)    # w1
        + 2 * (hidden * proj_p * 2)  # w2
        + 2 * (8 * wmax * 4)         # packed vectors
        + 2 * (bp * feat * 4)        # rep output
        + 2 * (bp * proj_p * 4))     # proj output
    vmem_limit = min(32 * 1024 * 1024, max(8 * 1024 * 1024,
                                           vmem_bytes + 4 * 1024 * 1024))

    rep, proj = pl.pallas_call(
        kernel,
        out_shape=(jax.ShapeDtypeStruct((bp, feat), jnp.float32),
                   jax.ShapeDtypeStruct((bp, proj_p), jnp.float32)),
        grid_spec=pltpu.PrefetchScalarGridSpec(
            num_scalar_prefetch=0,
            grid=(ksteps,),
            in_specs=[
                pl.BlockSpec((bp, tk), lambda k: (0, k)),          # x (bf16)
                pl.BlockSpec((tk, feat), lambda k: (k, 0)),        # w0 (streamed)
                pl.BlockSpec((feat, hidden), lambda k: (0, 0)),    # w1
                pl.BlockSpec((hidden, proj_p), lambda k: (0, 0)),  # w2
                pl.BlockSpec((8, wmax), lambda k: (0, 0)),         # packed b0/b1/gamma/beta/b2
            ],
            out_specs=(
                pl.BlockSpec((bp, feat), lambda k: (0, 0)),        # representation
                pl.BlockSpec((bp, proj_p), lambda k: (0, 0)),      # projection
            )),
        compiler_params=pltpu.CompilerParams(
            dimension_semantics=("arbitrary",),   # K reduction axis
            vmem_limit_bytes=vmem_limit),
        cost_estimate=pl.CostEstimate(
            flops=flops,
            transcendentals=hidden,
            bytes_accessed=bytes_accessed),
    )(x_p, w0, w1, w2, vecs)
    return rep, proj


def _choose_tk(d_pad, bp, feat, budget_bytes=8 * 1024 * 1024):
    """Pick the largest K tile that fits a conservative VMEM budget.

    Prefers a single K step (grid=(1,)); the per-step pipeline overhead
    (~0.35 us) otherwise dominates at these tiny shapes.
    """
    for tk in (d_pad, 4096, 2048, 1024, 512, 256):
        if tk <= d_pad and d_pad % tk == 0:
            # double-buffered bf16 x tile + w0 tile
            if 2 * 2 * tk * (bp + feat) <= budget_bytes:
                return tk
    return 256


# ----------------------------------------------------------------------------
# Plain-JAX glue: flatten NCHW, pad to TPU-friendly shapes, cast to bf16
# ----------------------------------------------------------------------------
@jax.jit
def net_wrapper_forward(x_nchw, params):
    """NetWrapper.forward(x) -> (projection, representation)."""
    B = x_nchw.shape[0]
    x_flat = x_nchw.reshape(B, -1)                                # flatten()
    d_in = x_flat.shape[1]

    feat = params["w0"].shape[1]
    hidden = params["w1"].shape[1]
    proj = params["w2"].shape[1]

    # Pad batch to 16 (bf16 sublane tile), d_in to a 256 multiple, and the
    # projection output to 128 lanes (lane-dense stores).
    b_pad = ((B + 15) // 16) * 16
    d_pad = ((d_in + 255) // 256) * 256
    proj_pad = ((proj + 127) // 128) * 128
    tk = _choose_tk(d_pad, b_pad, feat)

    # x cast to bf16 once here (halves its DMA bytes; no in-kernel convert).
    x_p = jnp.pad(x_flat.astype(jnp.bfloat16),
                  ((0, b_pad - B), (0, d_pad - d_in)))
    w0 = jnp.pad(params["w0"], ((0, d_pad - d_in), (0, 0))).astype(jnp.bfloat16)
    w1 = params["w1"].astype(jnp.bfloat16)
    w2 = jnp.pad(params["w2"], ((0, 0), (0, proj_pad - proj))).astype(jnp.bfloat16)

    # Pack the five tiny per-feature vectors into one f32 slab -> single DMA.
    wmax = max(feat, hidden, proj_pad)
    vecs = jnp.zeros((8, wmax), jnp.float32)
    vecs = vecs.at[0, :feat].set(params["b0"][0])
    vecs = vecs.at[1, :hidden].set(params["b1"][0])
    vecs = vecs.at[2, :hidden].set(params["gamma"][0])
    vecs = vecs.at[3, :hidden].set(params["beta"][0])
    vecs = vecs.at[4, :proj].set(params["b2"][0])

    rep_p, proj_p = _fused_forward(x_p, w0, w1, w2, vecs, batch=B, tk=tk)

    representation = rep_p[:B, :feat]
    projection = proj_p[:B, :proj]
    return projection, representation


# ----------------------------------------------------------------------------
# Parameter init (matches PyTorch nn.Linear / nn.BatchNorm1d defaults)
# ----------------------------------------------------------------------------
def init_params(key, d_in, feat, proj_hidden, proj_size):
    ks = jax.random.split(key, 6)
    scale0 = 1.0 / jnp.sqrt(d_in)
    scale1 = 1.0 / jnp.sqrt(feat)
    scale2 = 1.0 / jnp.sqrt(proj_hidden)
    return {
        # backbone Linear(d_in, feat)  (hooked layer = ReLU right after it)
        "w0": jax.random.uniform(ks[0], (d_in, feat), jnp.float32, -scale0, scale0),
        "b0": jax.random.uniform(ks[1], (1, feat), jnp.float32, -scale0, scale0),
        # projector Linear(feat, proj_hidden)
        "w1": jax.random.uniform(ks[2], (feat, proj_hidden), jnp.float32, -scale1, scale1),
        "b1": jax.random.uniform(ks[3], (1, proj_hidden), jnp.float32, -scale1, scale1),
        # BatchNorm1d(proj_hidden) affine params at init
        "gamma": jnp.ones((1, proj_hidden), jnp.float32),
        "beta": jnp.zeros((1, proj_hidden), jnp.float32),
        # projector Linear(proj_hidden, proj_size)
        "w2": jax.random.uniform(ks[4], (proj_hidden, proj_size), jnp.float32, -scale2, scale2),
        "b2": jax.random.uniform(ks[5], (1, proj_size), jnp.float32, -scale2, scale2),
    }


def _reference_forward(x_nchw, params):
    """Pure-JAX reference with the same bf16 MXU-operand casts."""
    B = x_nchw.shape[0]
    x = x_nchw.reshape(B, -1).astype(jnp.float32)
    h0 = jnp.dot(x.astype(jnp.bfloat16), params["w0"].astype(jnp.bfloat16),
                 preferred_element_type=jnp.float32) + params["b0"]
    rep = jnp.maximum(h0, 0.0)
    h = jnp.dot(rep.astype(jnp.bfloat16), params["w1"].astype(jnp.bfloat16),
                preferred_element_type=jnp.float32) + params["b1"]
    mean = jnp.mean(h, axis=0, keepdims=True)
    var = jnp.mean((h - mean) ** 2, axis=0, keepdims=True)
    hn = (h - mean) * jax.lax.rsqrt(var + 1e-5) * params["gamma"] + params["beta"]
    hn = jnp.maximum(hn, 0.0)
    out = jnp.dot(hn.astype(jnp.bfloat16), params["w2"].astype(jnp.bfloat16),
                  preferred_element_type=jnp.float32) + params["b2"]
    return out, rep


if __name__ == "__main__":
    B, C, H, W = 2, 4, 16, 16          # NCHW input
    FEAT = 128                          # hooked (layer=-2) hidden width
    PROJ_HIDDEN = 128                   # projection_hidden_size
    PROJ = 64                           # projection_size

    key = jax.random.PRNGKey(0)
    k_x, k_p = jax.random.split(key)
    x = jax.random.normal(k_x, (B, C, H, W), jnp.float32)
    params = init_params(k_p, C * H * W, FEAT, PROJ_HIDDEN, PROJ)

    projection, representation = net_wrapper_forward(x, params)
    jax.block_until_ready((projection, representation))

    assert projection.shape == (B, PROJ)
    assert representation.shape == (B, FEAT)

    # NOTE: bf16 casts of x and all weights mean results deviate slightly from
    # a full-f32 PyTorch forward; tolerance reflects that precision tradeoff.
    ref_proj, ref_rep = _reference_forward(x, params)
    assert jnp.allclose(representation, ref_rep, rtol=5e-2, atol=5e-2)
    assert jnp.allclose(projection, ref_proj, rtol=5e-2, atol=5e-2)
    print("KERNEL_OK")
</pallas_src>

<mosaic_0001>
module attributes {stable_mosaic.version = 11 : i64} {
  func.func @_netwrapper_kernel(%arg0: i32, %arg1: memref<16x1024xbf16, #tpu.memory_space<vmem>>, %arg2: memref<1024x128xbf16, #tpu.memory_space<vmem>>, %arg3: memref<128x128xbf16, #tpu.memory_space<vmem>>, %arg4: memref<128x128xbf16, #tpu.memory_space<vmem>>, %arg5: memref<8x128xf32, #tpu.memory_space<vmem>>, %arg6: memref<16x128xf32, #tpu.memory_space<vmem>>, %arg7: memref<16x128xf32, #tpu.memory_space<vmem>>) attributes {dimension_semantics = [#tpu.dimension_semantics<arbitrary>], iteration_bounds = array<i64: 1>, scalar_prefetch = 0 : i64, scratch_operands = 0 : i64, tpu.core_type = #tpu.core_type<tc>, window_params = [{transform_indices = @transform_0, window_bounds = array<i64: 16, 1024>}, {transform_indices = @transform_1, window_bounds = array<i64: 1024, 128>}, {pipeline_mode = #tpu.pipeline_mode<synchronous>, transform_indices = @transform_2, window_bounds = array<i64: 128, 128>}, {pipeline_mode = #tpu.pipeline_mode<synchronous>, transform_indices = @transform_3, window_bounds = array<i64: 128, 128>}, {pipeline_mode = #tpu.pipeline_mode<synchronous>, transform_indices = @transform_4, window_bounds = array<i64: 8, 128>}, {pipeline_mode = #tpu.pipeline_mode<synchronous>, transform_indices = @transform_5, window_bounds = array<i64: 16, 128>}, {pipeline_mode = #tpu.pipeline_mode<synchronous>, transform_indices = @transform_6, window_bounds = array<i64: 16, 128>}]} {
    %c0_i32 = arith.constant 0 : i32
    %0 = arith.cmpi eq, %arg0, %c0_i32 : i32
    %1 = arith.extui %0 : i1 to i32
    %c0_i32_0 = arith.constant 0 : i32
    %2 = arith.cmpi ne, %1, %c0_i32_0 : i32
    scf.if %2 {
      %c0_10 = arith.constant 0 : index
      %c0_11 = arith.constant 0 : index
      %12 = vector.load %arg5[%c0_10, %c0_11] : memref<8x128xf32, #tpu.memory_space<vmem>>, vector<1x128xf32>
      %13 = vector.shape_cast %12 : vector<1x128xf32> to vector<1x128xf32>
      %14 = vector.broadcast %13 : vector<1x128xf32> to vector<16x128xf32>
      %c0_12 = arith.constant 0 : index
      %c0_13 = arith.constant 0 : index
      %15 = vector.load %arg6[%c0_12, %c0_13] : memref<16x128xf32, #tpu.memory_space<vmem>>, vector<16x128xf32>
      tpu.vector_store %arg6[%c0_12, %c0_13], %14 {strides = array<i32>} : memref<16x128xf32, #tpu.memory_space<vmem>>, vector<16x128xf32>,
    } else {
    }
    %c0 = arith.constant 0 : index
    %c0_1 = arith.constant 0 : index
    %3 = vector.load %arg6[%c0, %c0_1] : memref<16x128xf32, #tpu.memory_space<vmem>>, vector<16x128xf32>
    %c0_2 = arith.constant 0 : index
    %c0_3 = arith.constant 0 : index
    %4 = vector.load %arg1[%c0_2, %c0_3] : memref<16x1024xbf16, #tpu.memory_space<vmem>>, vector<16x1024xbf16>
    %c0_4 = arith.constant 0 : index
    %c0_5 = arith.constant 0 : index
    %5 = vector.load %arg2[%c0_4, %c0_5] : memref<1024x128xbf16, #tpu.memory_space<vmem>>, vector<1024x128xbf16>
    %cst = arith.constant dense<0.000000e+00> : vector<16x128xf32>
    %6 = tpu.matmul %4, %5, %cst {dimension_numbers = #tpu.dot_dimension_numbers<[1], [0], [0], [1], [0, 0, 1, 1], [], []>} : vector<16x1024xbf16>, vector<1024x128xbf16>, vector<16x128xf32> -> vector<16x128xf32>
    %7 = arith.addf %3, %6 : vector<16x128xf32>
    %c0_6 = arith.constant 0 : index
    %c0_7 = arith.constant 0 : index
    %8 = vector.load %arg6[%c0_6, %c0_7] : memref<16x128xf32, #tpu.memory_space<vmem>>, vector<16x128xf32>
    tpu.vector_store %arg6[%c0_6, %c0_7], %7 {strides = array<i32>} : memref<16x128xf32, #tpu.memory_space<vmem>>, vector<16x128xf32>,
    %c0_i32_8 = arith.constant 0 : i32
    %9 = arith.cmpi eq, %arg0, %c0_i32_8 : i32
    %10 = arith.extui %9 : i1 to i32
    %c0_i32_9 = arith.constant 0 : i32
    %11 = arith.cmpi ne, %10, %c0_i32_9 : i32
    scf.if %11 {
      %c0_10 = arith.constant 0 : index
      %c0_11 = arith.constant 0 : index
      %12 = vector.load %arg6[%c0_10, %c0_11] : memref<16x128xf32, #tpu.memory_space<vmem>>, vector<16x128xf32>
      %cst_12 = arith.constant 0.000000e+00 : f32
      %13 = vector.broadcast %cst_12 : f32 to vector<16x128xf32>
      %14 = arith.maximumf %12, %13 : vector<16x128xf32>
      %c0_13 = arith.constant 0 : index
      %c0_14 = arith.constant 0 : index
      %15 = vector.load %arg6[%c0_13, %c0_14] : memref<16x128xf32, #tpu.memory_space<vmem>>, vector<16x128xf32>
      tpu.vector_store %arg6[%c0_13, %c0_14], %14 {strides = array<i32>} : memref<16x128xf32, #tpu.memory_space<vmem>>, vector<16x128xf32>,
      %c1 = arith.constant 1 : index
      %c0_15 = arith.constant 0 : index
      %16 = vector.load %arg5[%c1, %c0_15] : memref<8x128xf32, #tpu.memory_space<vmem>>, vector<1x128xf32>
      %c2 = arith.constant 2 : index
      %c0_16 = arith.constant 0 : index
      %17 = vector.load %arg5[%c2, %c0_16] : memref<8x128xf32, #tpu.memory_space<vmem>>, vector<1x128xf32>
      %c3 = arith.constant 3 : index
      %c0_17 = arith.constant 0 : index
      %18 = vector.load %arg5[%c3, %c0_17] : memref<8x128xf32, #tpu.memory_space<vmem>>, vector<1x128xf32>
      %c4 = arith.constant 4 : index
      %c0_18 = arith.constant 0 : index
      %19 = vector.load %arg5[%c4, %c0_18] : memref<8x128xf32, #tpu.memory_space<vmem>>, vector<1x128xf32>
      %20 = arith.truncf %14 : vector<16x128xf32> to vector<16x128xbf16>
      %c0_19 = arith.constant 0 : index
      %c0_20 = arith.constant 0 : index
      %21 = vector.load %arg3[%c0_19, %c0_20] : memref<128x128xbf16, #tpu.memory_space<vmem>>, vector<128x128xbf16>
      %cst_21 = arith.constant dense<0.000000e+00> : vector<16x128xf32>
      %22 = tpu.matmul %20, %21, %cst_21 {dimension_numbers = #tpu.dot_dimension_numbers<[1], [0], [0], [1], [0, 0, 1, 1], [], []>} : vector<16x128xbf16>, vector<128x128xbf16>, vector<16x128xf32> -> vector<16x128xf32>
      %23 = vector.broadcast %16 : vector<1x128xf32> to vector<16x128xf32>
      %24 = arith.addf %22, %23 : vector<16x128xf32>
      %25 = tpu.iota {dimensions = array<i32: 0>} : vector<16x128xi32>
      %c2_i32 = arith.constant 2 : i32
      %26 = vector.broadcast %c2_i32 : i32 to vector<16x128xi32>
      %27 = arith.cmpi slt, %25, %26 : vector<16x128xi32>
      %28 = arith.extui %27 : vector<16x128xi1> to vector<16x128xi32>
      %29 = arith.sitofp %28 : vector<16x128xi32> to vector<16x128xf32>
      %30 = arith.mulf %24, %29 : vector<16x128xf32>
      %cst_22 = arith.constant dense<0.000000e+00> : vector<128xf32>
      %31 = vector.multi_reduction <add>, %30, %cst_22 [0] : vector<16x128xf32> to vector<128xf32>
      %32 = vector.shape_cast %31 : vector<128xf32> to vector<1x128xf32>
      %cst_23 = arith.constant 5.000000e-01 : f32
      %33 = vector.broadcast %cst_23 : f32 to vector<1x128xf32>
      %34 = arith.mulf %32, %33 : vector<1x128xf32>
      %35 = vector.broadcast %34 : vector<1x128xf32> to vector<16x128xf32>
      %36 = arith.subf %24, %35 : vector<16x128xf32>
      %37 = arith.mulf %36, %29 : vector<16x128xf32>
      %38 = arith.mulf %37, %37 : vector<16x128xf32>
      %cst_24 = arith.constant dense<0.000000e+00> : vector<128xf32>
      %39 = vector.multi_reduction <add>, %38, %cst_24 [0] : vector<16x128xf32> to vector<128xf32>
      %40 = vector.shape_cast %39 : vector<128xf32> to vector<1x128xf32>
      %cst_25 = arith.constant 5.000000e-01 : f32
      %41 = vector.broadcast %cst_25 : f32 to vector<1x128xf32>
      %42 = arith.mulf %40, %41 : vector<1x128xf32>
      %cst_26 = arith.constant 9.99999974E-6 : f32
      %43 = vector.broadcast %cst_26 : f32 to vector<1x128xf32>
      %44 = arith.addf %42, %43 : vector<1x128xf32>
      %45 = math.rsqrt %44 : vector<1x128xf32>
      %46 = arith.mulf %17, %45 : vector<1x128xf32>
      %47 = vector.broadcast %34 : vector<1x128xf32> to vector<16x128xf32>
      %48 = arith.subf %24, %47 : vector<16x128xf32>
      %49 = vector.broadcast %46 : vector<1x128xf32> to vector<16x128xf32>
      %50 = arith.mulf %48, %49 : vector<16x128xf32>
      %51 = vector.broadcast %18 : vector<1x128xf32> to vector<16x128xf32>
      %52 = arith.addf %50, %51 : vector<16x128xf32>
      %cst_27 = arith.constant 0.000000e+00 : f32
      %53 = vector.broadcast %cst_27 : f32 to vector<16x128xf32>
      %54 = arith.maximumf %52, %53 : vector<16x128xf32>
      %55 = arith.truncf %54 : vector<16x128xf32> to vector<16x128xbf16>
      %c0_28 = arith.constant 0 : index
      %c0_29 = arith.constant 0 : index
      %56 = vector.load %arg4[%c0_28, %c0_29] : memref<128x128xbf16, #tpu.memory_space<vmem>>, vector<128x128xbf16>
      %cst_30 = arith.constant dense<0.000000e+00> : vector<16x128xf32>
      %57 = tpu.matmul %55, %56, %cst_30 {dimension_numbers = #tpu.dot_dimension_numbers<[1], [0], [0], [1], [0, 0, 1, 1], [], []>} : vector<16x128xbf16>, vector<128x128xbf16>, vector<16x128xf32> -> vector<16x128xf32>
      %58 = vector.broadcast %19 : vector<1x128xf32> to vector<16x128xf32>
      %59 = arith.addf %57, %58 : vector<16x128xf32>
      %c0_31 = arith.constant 0 : index
      %c0_32 = arith.constant 0 : index
      %60 = vector.load %arg7[%c0_31, %c0_32] : memref<16x128xf32, #tpu.memory_space<vmem>>, vector<16x128xf32>
      tpu.vector_store %arg7[%c0_31, %c0_32], %59 {strides = array<i32>} : memref<16x128xf32, #tpu.memory_space<vmem>>, vector<16x128xf32>,
    } else {
    }
    return
  }
  func.func @transform_0(%arg0: i32) -> (i32, i32) {
    %c0_i32 = arith.constant 0 : i32
    %c0_i32_0 = arith.constant 0 : i32
    return %c0_i32, %arg0 : i32, i32
  }
  func.func @transform_1(%arg0: i32) -> (i32, i32) {
    %c0_i32 = arith.constant 0 : i32
    %c0_i32_0 = arith.constant 0 : i32
    return %arg0, %c0_i32 : i32, i32
  }
  func.func @transform_2(%arg0: i32) -> (i32, i32) {
    %c0_i32 = arith.constant 0 : i32
    %c0_i32_0 = arith.constant 0 : i32
    %c0_i32_1 = arith.constant 0 : i32
    return %c0_i32, %c0_i32_0 : i32, i32
  }
  func.func @transform_3(%arg0: i32) -> (i32, i32) {
    %c0_i32 = arith.constant 0 : i32
    %c0_i32_0 = arith.constant 0 : i32
    %c0_i32_1 = arith.constant 0 : i32
    return %c0_i32, %c0_i32_0 : i32, i32
  }
  func.func @transform_4(%arg0: i32) -> (i32, i32) {
    %c0_i32 = arith.constant 0 : i32
    %c0_i32_0 = arith.constant 0 : i32
    %c0_i32_1 = arith.constant 0 : i32
    return %c0_i32, %c0_i32_0 : i32, i32
  }
  func.func @transform_5(%arg0: i32) -> (i32, i32) {
    %c0_i32 = arith.constant 0 : i32
    %c0_i32_0 = arith.constant 0 : i32
    %c0_i32_1 = arith.constant 0 : i32
    return %c0_i32, %c0_i32_0 : i32, i32
  }
  func.func @transform_6(%arg0: i32) -> (i32, i32) {
    %c0_i32 = arith.constant 0 : i32
    %c0_i32_0 = arith.constant 0 : i32
    %c0_i32_1 = arith.constant 0 : i32
    return %c0_i32, %c0_i32_0 : i32, i32
  }
}

</mosaic_0001>

<llo_original>
// kernel: net_wrapper_forward.1
$region0: #{net_wrapper_forward.1}
  #allocation0 [shape = 'u32[]', space=smem, size = 0x4, offset = 0x4, fixed_abs, tag = 'smem constant byte address 0x4 - core index']
  #allocation1 [shape = 'u32[144,128]{1,0:T(1,128)}', space=vmem, size = 0x12000, scoped, tag = 'internal scratch']
  %s0 = inlined_call_operand.vmem [shape: bf16[16,1024], index: 0, kind: input, shape index: {}]
  %s1 = inlined_call_operand.vmem [shape: bf16[1024,128], index: 1, kind: input, shape index: {}]
  %s2 = inlined_call_operand.vmem [shape: bf16[128,128], index: 2, kind: input, shape index: {}]
  %s3 = inlined_call_operand.vmem [shape: bf16[128,128], index: 3, kind: input, shape index: {}]
  %s4 = inlined_call_operand.vmem [shape: f32[8,128], index: 4, kind: input, shape index: {}]
  %s5 = inlined_call_operand.vmem [shape: f32[16,128], index: 5, kind: output, shape index: {0}]
  %s6 = inlined_call_operand.vmem [shape: f32[16,128], index: 6, kind: output, shape index: {1}]
  %7 = xla_tuple %s5, %s6
  %s8 = sld [smem:[#allocation0]]
  $region46: #{net_wrapper_forward.1} parent=0
    _
  %s10 = ssub.s32 1, %s8
  %s11 = scalar_select 0, %s10, %s8
  // Predicated region
  $region2: #{net_wrapper_forward.1} parent=0 // pred_check
    _
  $region3: #{net_wrapper_forward.1} parent=0 // pred_check_branch
    %13 = sbr.rel (0) target = $region5
  $region4: #{net_wrapper_forward.1} parent=0 // pred_region
    _
  $region5: #{net_wrapper_forward.1} parent=0 // pred_fallthru
    _
  // Predicated region
  $region6: #{net_wrapper_forward.1} parent=0 // pred_check
    _
  $region7: #{net_wrapper_forward.1} parent=0 // pred_check_branch
    %15 = sbr.rel (0) target = $region9
  $region8: #{net_wrapper_forward.1} parent=0 // pred_region
    _
  $region9: #{net_wrapper_forward.1} parent=0 // pred_fallthru
    _
  // Predicated region
  $region10: #{net_wrapper_forward.1} parent=0 // pred_check
    _
  $region11: #{net_wrapper_forward.1} parent=0 // pred_check_branch
    %17 = sbr.rel (0) target = $region13
  $region12: #{net_wrapper_forward.1} parent=0 // pred_region
    _
  $region13: #{net_wrapper_forward.1} parent=0 // pred_fallthru
    _
  // Predicated region
  $region14: #{net_wrapper_forward.1} parent=0 // pred_check
    _
  $region15: #{net_wrapper_forward.1} parent=0 // pred_check_branch
    %19 = sbr.rel (0) target = $region17
  $region16: #{net_wrapper_forward.1} parent=0 // pred_region
    _
  $region17: #{net_wrapper_forward.1} parent=0 // pred_fallthru
    _
  // Predicated region
  $region18: #{net_wrapper_forward.1} parent=0 // pred_check
    _
  $region19: #{net_wrapper_forward.1} parent=0 // pred_check_branch
    %21 = sbr.rel (0) target = $region21
  $region20: #{net_wrapper_forward.1} parent=0 // pred_region
    _
  $region21: #{net_wrapper_forward.1} parent=0 // pred_fallthru
    _
  %p23 = scmp.eq.s32.totalorder 0, 0
  // Predicated region
  $region22: #{net_wrapper_forward.1} parent=0 // pred_check
    %p24 = pneg %p23
  $region23: #{net_wrapper_forward.1} parent=0 // pred_check_branch
    %26 = sbr.rel (%p24) target = $region25
  $region24: #{net_wrapper_forward.1} parent=0 // pred_region
    %v27 = vld [vmem:[%s4] sm:$0x1]
    %v28 = vlaneseq
    %v29 = vshrl.u32 %v28, 7
    %v30 = vsub.s32 0, %v29
    %v31 = vrot.slane %v27, %v30
    %32 = vst [vmem:[%s5] sm:$0xff] %v31
    %33 = vst [vmem:[%s5 + $0x8] sm:$0xff] %v31
  $region25: #{net_wrapper_forward.1} parent=0 // pred_fallthru
    _
  %v34 = vld [vmem:[%s5] sm:$0xff]
  %v35 = vld [vmem:[%s5 + $0x8] sm:$0xff]
  %v36 = vld [vmem:[%s0] sm:$0xff]
  %v37 = vld [vmem:[%s0 + $0x8] sm:$0xff]
  %v38 = vld [vmem:[%s0 + $0x10] sm:$0xff]
  %v39 = vld [vmem:[%s0 + $0x18] sm:$0xff]
  %v40 = vld [vmem:[%s0 + $0x20] sm:$0xff]
  %v41 = vld [vmem:[%s0 + $0x28] sm:$0xff]
  %v42 = vld [vmem:[%s0 + $0x30] sm:$0xff]
  %v43 = vld [vmem:[%s0 + $0x38] sm:$0xff]
  %v44 = vld [vmem:[%s1] sm:$0xf]
  %v45 = vld [vmem:[%s1 + $0x4] sm:$0xf]
  %v46 = vld [vmem:[%s1 + $0x8] sm:$0xf]
  %v47 = vld [vmem:[%s1 + $0xc] sm:$0xf]
  %v48 = vld [vmem:[%s1 + $0x10] sm:$0xf]
  %v49 = vld [vmem:[%s1 + $0x14] sm:$0xf]
  %v50 = vld [vmem:[%s1 + $0x18] sm:$0xf]
  %v51 = vld [vmem:[%s1 + $0x1c] sm:$0xf]
  %v52 = vld [vmem:[%s1 + $0x20] sm:$0xf]
  %v53 = vld [vmem:[%s1 + $0x24] sm:$0xf]
  %v54 = vld [vmem:[%s1 + $0x28] sm:$0xf]
  %v55 = vld [vmem:[%s1 + $0x2c] sm:$0xf]
  %v56 = vld [vmem:[%s1 + $0x30] sm:$0xf]
  %v57 = vld [vmem:[%s1 + $0x34] sm:$0xf]
  %v58 = vld [vmem:[%s1 + $0x38] sm:$0xf]
  %v59 = vld [vmem:[%s1 + $0x3c] sm:$0xf]
  %v60 = vld [vmem:[%s1 + $0x40] sm:$0xf]
  %v61 = vld [vmem:[%s1 + $0x44] sm:$0xf]
  %v62 = vld [vmem:[%s1 + $0x48] sm:$0xf]
  %v63 = vld [vmem:[%s1 + $0x4c] sm:$0xf]
  %v64 = vld [vmem:[%s1 + $0x50] sm:$0xf]
  %v65 = vld [vmem:[%s1 + $0x54] sm:$0xf]
  %v66 = vld [vmem:[%s1 + $0x58] sm:$0xf]
  %v67 = vld [vmem:[%s1 + $0x5c] sm:$0xf]
  %v68 = vld [vmem:[%s1 + $0x60] sm:$0xf]
  %v69 = vld [vmem:[%s1 + $0x64] sm:$0xf]
  %v70 = vld [vmem:[%s1 + $0x68] sm:$0xf]
  %v71 = vld [vmem:[%s1 + $0x6c] sm:$0xf]
  %v72 = vld [vmem:[%s1 + $0x70] sm:$0xf]
  %v73 = vld [vmem:[%s1 + $0x74] sm:$0xf]
  %v74 = vld [vmem:[%s1 + $0x78] sm:$0xf]
  %v75 = vld [vmem:[%s1 + $0x7c] sm:$0xf]
  %v76 = vld [vmem:[%s1 + $0x80] sm:$0xf]
  %v77 = vld [vmem:[%s1 + $0x84] sm:$0xf]
  %v78 = vld [vmem:[%s1 + $0x88] sm:$0xf]
  %v79 = vld [vmem:[%s1 + $0x8c] sm:$0xf]
  %v80 = vld [vmem:[%s1 + $0x90] sm:$0xf]
  %v81 = vld [vmem:[%s1 + $0x94] sm:$0xf]
  %v82 = vld [vmem:[%s1 + $0x98] sm:$0xf]
  %v83 = vld [vmem:[%s1 + $0x9c] sm:$0xf]
  %v84 = vld [vmem:[%s1 + $0xa0] sm:$0xf]
  %v85 = vld [vmem:[%s1 + $0xa4] sm:$0xf]
  %v86 = vld [vmem:[%s1 + $0xa8] sm:$0xf]
  %v87 = vld [vmem:[%s1 + $0xac] sm:$0xf]
  %v88 = vld [vmem:[%s1 + $0xb0] sm:$0xf]
  %v89 = vld [vmem:[%s1 + $0xb4] sm:$0xf]
  %v90 = vld [vmem:[%s1 + $0xb8] sm:$0xf]
  %v91 = vld [vmem:[%s1 + $0xbc] sm:$0xf]
  %v92 = vld [vmem:[%s1 + $0xc0] sm:$0xf]
  %v93 = vld [vmem:[%s1 + $0xc4] sm:$0xf]
  %v94 = vld [vmem:[%s1 + $0xc8] sm:$0xf]
  %v95 = vld [vmem:[%s1 + $0xcc] sm:$0xf]
  %v96 = vld [vmem:[%s1 + $0xd0] sm:$0xf]
  %v97 = vld [vmem:[%s1 + $0xd4] sm:$0xf]
  %v98 = vld [vmem:[%s1 + $0xd8] sm:$0xf]
  %v99 = vld [vmem:[%s1 + $0xdc] sm:$0xf]
  %v100 = vld [vmem:[%s1 + $0xe0] sm:$0xf]
  %v101 = vld [vmem:[%s1 + $0xe4] sm:$0xf]
  %v102 = vld [vmem:[%s1 + $0xe8] sm:$0xf]
  %v103 = vld [vmem:[%s1 + $0xec] sm:$0xf]
  %v104 = vld [vmem:[%s1 + $0xf0] sm:$0xf]
  %v105 = vld [vmem:[%s1 + $0xf4] sm:$0xf]
  %v106 = vld [vmem:[%s1 + $0xf8] sm:$0xf]
  %v107 = vld [vmem:[%s1 + $0xfc] sm:$0xf]
  %v108 = vld [vmem:[%s1 + $0x100] sm:$0xf]
  %v109 = vld [vmem:[%s1 + $0x104] sm:$0xf]
  %v110 = vld [vmem:[%s1 + $0x108] sm:$0xf]
  %v111 = vld [vmem:[%s1 + $0x10c] sm:$0xf]
  %v112 = vld [vmem:[%s1 + $0x110] sm:$0xf]
  %v113 = vld [vmem:[%s1 + $0x114] sm:$0xf]
  %v114 = vld [vmem:[%s1 + $0x118] sm:$0xf]
  %v115 = vld [vmem:[%s1 + $0x11c] sm:$0xf]
  %v116 = vld [vmem:[%s1 + $0x120] sm:$0xf]
  %v117 = vld [vmem:[%s1 + $0x124] sm:$0xf]
  %v118 = vld [vmem:[%s1 + $0x128] sm:$0xf]
  %v119 = vld [vmem:[%s1 + $0x12c] sm:$0xf]
  %v120 = vld [vmem:[%s1 + $0x130] sm:$0xf]
  %v121 = vld [vmem:[%s1 + $0x134] sm:$0xf]
  %v122 = vld [vmem:[%s1 + $0x138] sm:$0xf]
  %v123 = vld [vmem:[%s1 + $0x13c] sm:$0xf]
  %v124 = vld [vmem:[%s1 + $0x140] sm:$0xf]
  %v125 = vld [vmem:[%s1 + $0x144] sm:$0xf]
  %v126 = vld [vmem:[%s1 + $0x148] sm:$0xf]
  %v127 = vld [vmem:[%s1 + $0x14c] sm:$0xf]
  %v128 = vld [vmem:[%s1 + $0x150] sm:$0xf]
  %v129 = vld [vmem:[%s1 + $0x154] sm:$0xf]
  %v130 = vld [vmem:[%s1 + $0x158] sm:$0xf]
  %v131 = vld [vmem:[%s1 + $0x15c] sm:$0xf]
  %v132 = vld [vmem:[%s1 + $0x160] sm:$0xf]
  %v133 = vld [vmem:[%s1 + $0x164] sm:$0xf]
  %v134 = vld [vmem:[%s1 + $0x168] sm:$0xf]
  %v135 = vld [vmem:[%s1 + $0x16c] sm:$0xf]
  %v136 = vld [vmem:[%s1 + $0x170] sm:$0xf]
  %v137 = vld [vmem:[%s1 + $0x174] sm:$0xf]
  %v138 = vld [vmem:[%s1 + $0x178] sm:$0xf]
  %v139 = vld [vmem:[%s1 + $0x17c] sm:$0xf]
  %v140 = vld [vmem:[%s1 + $0x180] sm:$0xf]
  %v141 = vld [vmem:[%s1 + $0x184] sm:$0xf]
  %v142 = vld [vmem:[%s1 + $0x188] sm:$0xf]
  %v143 = vld [vmem:[%s1 + $0x18c] sm:$0xf]
  %v144 = vld [vmem:[%s1 + $0x190] sm:$0xf]
  %v145 = vld [vmem:[%s1 + $0x194] sm:$0xf]
  %v146 = vld [vmem:[%s1 + $0x198] sm:$0xf]
  %v147 = vld [vmem:[%s1 + $0x19c] sm:$0xf]
  %v148 = vld [vmem:[%s1 + $0x1a0] sm:$0xf]
  %v149 = vld [vmem:[%s1 + $0x1a4] sm:$0xf]
  %v150 = vld [vmem:[%s1 + $0x1a8] sm:$0xf]
  %v151 = vld [vmem:[%s1 + $0x1ac] sm:$0xf]
  %v152 = vld [vmem:[%s1 + $0x1b0] sm:$0xf]
  %v153 = vld [vmem:[%s1 + $0x1b4] sm:$0xf]
  %v154 = vld [vmem:[%s1 + $0x1b8] sm:$0xf]
  %v155 = vld [vmem:[%s1 + $0x1bc] sm:$0xf]
  %v156 = vld [vmem:[%s1 + $0x1c0] sm:$0xf]
  %v157 = vld [vmem:[%s1 + $0x1c4] sm:$0xf]
  %v158 = vld [vmem:[%s1 + $0x1c8] sm:$0xf]
  %v159 = vld [vmem:[%s1 + $0x1cc] sm:$0xf]
  %v160 = vld [vmem:[%s1 + $0x1d0] sm:$0xf]
  %v161 = vld [vmem:[%s1 + $0x1d4] sm:$0xf]
  %v162 = vld [vmem:[%s1 + $0x1d8] sm:$0xf]
  %v163 = vld [vmem:[%s1 + $0x1dc] sm:$0xf]
  %v164 = vld [vmem:[%s1 + $0x1e0] sm:$0xf]
  %v165 = vld [vmem:[%s1 + $0x1e4] sm:$0xf]
  %v166 = vld [vmem:[%s1 + $0x1e8] sm:$0xf]
  %v167 = vld [vmem:[%s1 + $0x1ec] sm:$0xf]
  %v168 = vld [vmem:[%s1 + $0x1f0] sm:$0xf]
  %v169 = vld [vmem:[%s1 + $0x1f4] sm:$0xf]
  %v170 = vld [vmem:[%s1 + $0x1f8] sm:$0xf]
  %v171 = vld [vmem:[%s1 + $0x1fc] sm:$0xf]
  %v180 = vunpack.c.l.b16 %v36
  %v181 = vunpack.c.h.b16 %v36
  %v182 = vunpack.c.l.b16 %v37
  %v183 = vunpack.c.h.b16 %v37
  %v184 = vunpack.c.l.b16 %v38
  %v185 = vunpack.c.h.b16 %v38
  %v186 = vunpack.c.l.b16 %v39
  %v187 = vunpack.c.h.b16 %v39
  %v188 = vunpack.c.l.b16 %v40
  %v189 = vunpack.c.h.b16 %v40
  %v190 = vunpack.c.l.b16 %v41
  %v191 = vunpack.c.h.b16 %v41
  %v192 = vunpack.c.l.b16 %v42
  %v193 = vunpack.c.h.b16 %v42
  %v194 = vunpack.c.l.b16 %v43
  %v195 = vunpack.c.h.b16 %v43
  %v196 = vpack.c.b16 %v188, %v180
  %v197 = vpack.c.b16 %v189, %v181
  %v198 = vpack.c.b16 %v190, %v182
  %v199 = vpack.c.b16 %v191, %v183
  %v200 = vpack.c.b16 %v192, %v184
  %v201 = vpack.c.b16 %v193, %v185
  %v202 = vpack.c.b16 %v194, %v186
  %v203 = vpack.c.b16 %v195, %v187
  %v340 = vunpack.c.l.b16 %v44
  %v341 = vunpack.c.l.b16 %v45
  %v342 = vunpack.c.l.b16 %v46
  %v343 = vunpack.c.l.b16 %v47
  %v344 = vunpack.c.l.b16 %v48
  %v345 = vunpack.c.l.b16 %v49
  %v346 = vunpack.c.l.b16 %v50
  %v347 = vunpack.c.l.b16 %v51
  %v348 = vunpack.c.l.b16 %v52
  %v349 = vunpack.c.l.b16 %v53
  %v350 = vunpack.c.l.b16 %v54
  %v351 = vunpack.c.l.b16 %v55
  %v352 = vunpack.c.l.b16 %v56
  %v353 = vunpack.c.l.b16 %v57
  %v354 = vunpack.c.l.b16 %v58
  %v355 = vunpack.c.l.b16 %v59
  %v356 = vunpack.c.l.b16 %v60
  %v357 = vunpack.c.l.b16 %v61
  %v358 = vunpack.c.l.b16 %v62
  %v359 = vunpack.c.l.b16 %v63
  %v360 = vunpack.c.l.b16 %v64
  %v361 = vunpack.c.l.b16 %v65
  %v362 = vunpack.c.l.b16 %v66
  %v363 = vunpack.c.l.b16 %v67
  %v364 = vunpack.c.l.b16 %v68
  %v365 = vunpack.c.l.b16 %v69
  %v366 = vunpack.c.l.b16 %v70
  %v367 = vunpack.c.l.b16 %v71
  %v368 = vunpack.c.l.b16 %v72
  %v369 = vunpack.c.l.b16 %v73
  %v370 = vunpack.c.l.b16 %v74
  %v371 = vunpack.c.l.b16 %v75
  %v372 = vunpack.c.l.b16 %v76
  %v373 = vunpack.c.l.b16 %v77
  %v374 = vunpack.c.l.b16 %v78
  %v375 = vunpack.c.l.b16 %v79
  %v376 = vunpack.c.l.b16 %v80
  %v377 = vunpack.c.l.b16 %v81
  %v378 = vunpack.c.l.b16 %v82
  %v379 = vunpack.c.l.b16 %v83
  %v380 = vunpack.c.l.b16 %v84
  %v381 = vunpack.c.l.b16 %v85
  %v382 = vunpack.c.l.b16 %v86
  %v383 = vunpack.c.l.b16 %v87
  %v384 = vunpack.c.l.b16 %v88
  %v385 = vunpack.c.l.b16 %v89
  %v386 = vunpack.c.l.b16 %v90
  %v387 = vunpack.c.l.b16 %v91
  %v388 = vunpack.c.l.b16 %v92
  %v389 = vunpack.c.l.b16 %v93
  %v390 = vunpack.c.l.b16 %v94
  %v391 = vunpack.c.l.b16 %v95
  %v392 = vunpack.c.l.b16 %v96
  %v393 = vunpack.c.l.b16 %v97
  %v394 = vunpack.c.l.b16 %v98
  %v395 = vunpack.c.l.b16 %v99
  %v396 = vunpack.c.l.b16 %v100
  %v397 = vunpack.c.l.b16 %v101
  %v398 = vunpack.c.l.b16 %v102
  %v399 = vunpack.c.l.b16 %v103
  %v400 = vunpack.c.l.b16 %v104
  %v401 = vunpack.c.l.b16 %v105
  %v402 = vunpack.c.l.b16 %v106
  %v403 = vunpack.c.l.b16 %v107
  %v404 = vunpack.c.l.b16 %v108
  %v405 = vunpack.c.l.b16 %v109
  %v406 = vunpack.c.l.b16 %v110
  %v407 = vunpack.c.l.b16 %v111
  %v408 = vunpack.c.l.b16 %v112
  %v409 = vunpack.c.l.b16 %v113
  %v410 = vunpack.c.l.b16 %v114
  %v411 = vunpack.c.l.b16 %v115
  %v412 = vunpack.c.l.b16 %v116
  %v413 = vunpack.c.l.b16 %v117
  %v414 = vunpack.c.l.b16 %v118
  %v415 = vunpack.c.l.b16 %v119
  %v416 = vunpack.c.l.b16 %v120
  %v417 = vunpack.c.l.b16 %v121
  %v418 = vunpack.c.l.b16 %v122
  %v419 = vunpack.c.l.b16 %v123
  %v420 = vunpack.c.l.b16 %v124
  %v421 = vunpack.c.l.b16 %v125
  %v422 = vunpack.c.l.b16 %v126
  %v423 = vunpack.c.l.b16 %v127
  %v424 = vunpack.c.l.b16 %v128
  %v425 = vunpack.c.l.b16 %v129
  %v426 = vunpack.c.l.b16 %v130
  %v427 = vunpack.c.l.b16 %v131
  %v428 = vunpack.c.l.b16 %v132
  %v429 = vunpack.c.l.b16 %v133
  %v430 = vunpack.c.l.b16 %v134
  %v431 = vunpack.c.l.b16 %v135
  %v432 = vunpack.c.l.b16 %v136
  %v433 = vunpack.c.l.b16 %v137
  %v434 = vunpack.c.l.b16 %v138
  %v435 = vunpack.c.l.b16 %v139
  %v436 = vunpack.c.l.b16 %v140
  %v437 = vunpack.c.l.b16 %v141
  %v438 = vunpack.c.l.b16 %v142
  %v439 = vunpack.c.l.b16 %v143
  %v440 = vunpack.c.l.b16 %v144
  %v441 = vunpack.c.l.b16 %v145
  %v442 = vunpack.c.l.b16 %v146
  %v443 = vunpack.c.l.b16 %v147
  %v444 = vunpack.c.l.b16 %v148
  %v445 = vunpack.c.l.b16 %v149
  %v446 = vunpack.c.l.b16 %v150
  %v447 = vunpack.c.l.b16 %v151
  %v448 = vunpack.c.l.b16 %v152
  %v449 = vunpack.c.l.b16 %v153
  %v450 = vunpack.c.l.b16 %v154
  %v451 = vunpack.c.l.b16 %v155
  %v452 = vunpack.c.l.b16 %v156
  %v453 = vunpack.c.l.b16 %v157
  %v454 = vunpack.c.l.b16 %v158
  %v455 = vunpack.c.l.b16 %v159
  %v456 = vunpack.c.l.b16 %v160
  %v457 = vunpack.c.l.b16 %v161
  %v458 = vunpack.c.l.b16 %v162
  %v459 = vunpack.c.l.b16 %v163
  %v460 = vunpack.c.l.b16 %v164
  %v461 = vunpack.c.l.b16 %v165
  %v462 = vunpack.c.l.b16 %v166
  %v463 = vunpack.c.l.b16 %v167
  %v464 = vunpack.c.l.b16 %v168
  %v465 = vunpack.c.l.b16 %v169
  %v466 = vunpack.c.l.b16 %v170
  %v467 = vunpack.c.l.b16 %v171
  %v468 = vpack.c.b16 %v341, %v340
  %v469 = vpack.c.b16 %v343, %v342
  %v470 = vpack.c.b16 %v345, %v344
  %v471 = vpack.c.b16 %v347, %v346
  %v472 = vpack.c.b16 %v349, %v348
  %v473 = vpack.c.b16 %v351, %v350
  %v474 = vpack.c.b16 %v353, %v352
  %v475 = vpack.c.b16 %v355, %v354
  %v476 = vpack.c.b16 %v357, %v356
  %v477 = vpack.c.b16 %v359, %v358
  %v478 = vpack.c.b16 %v361, %v360
  %v479 = vpack.c.b16 %v363, %v362
  %v480 = vpack.c.b16 %v365, %v364
  %v481 = vpack.c.b16 %v367, %v366
  %v482 = vpack.c.b16 %v369, %v368
  %v483 = vpack.c.b16 %v371, %v370
  %v484 = vpack.c.b16 %v373, %v372
  %v485 = vpack.c.b16 %v375, %v374
  %v486 = vpack.c.b16 %v377, %v376
  %v487 = vpack.c.b16 %v379, %v378
  %v488 = vpack.c.b16 %v381, %v380
  %v489 = vpack.c.b16 %v383, %v382
  %v490 = vpack.c.b16 %v385, %v384
  %v491 = vpack.c.b16 %v387, %v386
  %v492 = vpack.c.b16 %v389, %v388
  %v493 = vpack.c.b16 %v391, %v390
  %v494 = vpack.c.b16 %v393, %v392
  %v495 = vpack.c.b16 %v395, %v394
  %v496 = vpack.c.b16 %v397, %v396
  %v497 = vpack.c.b16 %v399, %v398
  %v498 = vpack.c.b16 %v401, %v400
  %v499 = vpack.c.b16 %v403, %v402
  %v500 = vpack.c.b16 %v405, %v404
  %v501 = vpack.c.b16 %v407, %v406
  %v502 = vpack.c.b16 %v409, %v408
  %v503 = vpack.c.b16 %v411, %v410
  %v504 = vpack.c.b16 %v413, %v412
  %v505 = vpack.c.b16 %v415, %v414
  %v506 = vpack.c.b16 %v417, %v416
  %v507 = vpack.c.b16 %v419, %v418
  %v508 = vpack.c.b16 %v421, %v420
  %v509 = vpack.c.b16 %v423, %v422
  %v510 = vpack.c.b16 %v425, %v424
  %v511 = vpack.c.b16 %v427, %v426
  %v512 = vpack.c.b16 %v429, %v428
  %v513 = vpack.c.b16 %v431, %v430
  %v514 = vpack.c.b16 %v433, %v432
  %v515 = vpack.c.b16 %v435, %v434
  %v516 = vpack.c.b16 %v437, %v436
  %v517 = vpack.c.b16 %v439, %v438
  %v518 = vpack.c.b16 %v441, %v440
  %v519 = vpack.c.b16 %v443, %v442
  %v520 = vpack.c.b16 %v445, %v444
  %v521 = vpack.c.b16 %v447, %v446
  %v522 = vpack.c.b16 %v449, %v448
  %v523 = vpack.c.b16 %v451, %v450
  %v524 = vpack.c.b16 %v453, %v452
  %v525 = vpack.c.b16 %v455, %v454
  %v526 = vpack.c.b16 %v457, %v456
  %v527 = vpack.c.b16 %v459, %v458
  %v528 = vpack.c.b16 %v461, %v460
  %v529 = vpack.c.b16 %v463, %v462
  %v530 = vpack.c.b16 %v465, %v464
  %v531 = vpack.c.b16 %v467, %v466
  %596 = vmatprep.subr.bf16.mxu0 0
  %597 = vmatpush1.bf16.msra.mxu0 %v468
  %598 = vmatprep.subr.bf16.mxu0 0
  %599 = vmatpush1.bf16.msra.mxu0 %v469
  %600 = vmatprep.subr.bf16.mxu0 0
  %601 = vmatpush1.bf16.msra.mxu0 %v470
  %602 = vmatprep.subr.bf16.mxu0 0
  %603 = vmatpush1.bf16.msra.mxu0 %v471
  %604 = vmatprep.subr.bf16.mxu0 0
  %605 = vmatpush1.bf16.msra.mxu0 %v472
  %606 = vmatprep.subr.bf16.mxu0 0
  %607 = vmatpush1.bf16.msra.mxu0 %v473
  %608 = vmatprep.subr.bf16.mxu0 0
  %609 = vmatpush1.bf16.msra.mxu0 %v474
  %610 = vmatprep.subr.bf16.mxu0 0
  %611 = vmatpush1.bf16.msra.mxu0 %v475
  %612 = vmatprep.subr.bf16.mxu0 0
  %613 = vmatpush1.bf16.msra.mxu0 %v476
  %614 = vmatprep.subr.bf16.mxu0 0
  %615 = vmatpush1.bf16.msra.mxu0 %v477
  %616 = vmatprep.subr.bf16.mxu0 0
  %617 = vmatpush1.bf16.msra.mxu0 %v478
  %618 = vmatprep.subr.bf16.mxu0 0
  %619 = vmatpush1.bf16.msra.mxu0 %v479
  %620 = vmatprep.subr.bf16.mxu0 0
  %621 = vmatpush1.bf16.msra.mxu0 %v480
  %622 = vmatprep.subr.bf16.mxu0 0
  %623 = vmatpush1.bf16.msra.mxu0 %v481
  %624 = vmatprep.subr.bf16.mxu0 0
  %625 = vmatpush1.bf16.msra.mxu0 %v482
  %626 = vmatprep.subr.bf16.mxu0 0
  %627 = vmatpush1.bf16.msra.mxu0 %v483
  %628 = vmatprep.mubr.bf16.mxu0 %v197
  %629 = vmatmul.mubr.bf16.gmra.mrb[0].mxu0 %v196
  %v630 = vpop.f32.mrb[0].mxu0
  %v631 = vadd.f32 0.0, %v630
  %v632 = vpop.f32.mrb[0].mxu0
  %v633 = vpop.f32.mrb[0].mxu0
  %v634 = vadd.f32 0.0, %v633
  %v635 = vpop.f32.mrb[0].mxu0
  %636 = vdwg.mxu0
  %637 = vmatprep.subr.bf16.mxu0 0
  %638 = vmatpush1.bf16.msra.mxu0 %v484
  %639 = vmatprep.subr.bf16.mxu0 0
  %640 = vmatpush1.bf16.msra.mxu0 %v485
  %641 = vmatprep.subr.bf16.mxu0 0
  %642 = vmatpush1.bf16.msra.mxu0 %v486
  %643 = vmatprep.subr.bf16.mxu0 0
  %644 = vmatpush1.bf16.msra.mxu0 %v487
  %645 = vmatprep.subr.bf16.mxu0 0
  %646 = vmatpush1.bf16.msra.mxu0 %v488
  %647 = vmatprep.subr.bf16.mxu0 0
  %648 = vmatpush1.bf16.msra.mxu0 %v489
  %649 = vmatprep.subr.bf16.mxu0 0
  %650 = vmatpush1.bf16.msra.mxu0 %v490
  %651 = vmatprep.subr.bf16.mxu0 0
  %652 = vmatpush1.bf16.msra.mxu0 %v491
  %653 = vmatprep.subr.bf16.mxu0 0
  %654 = vmatpush1.bf16.msra.mxu0 %v492
  %655 = vmatprep.subr.bf16.mxu0 0
  %656 = vmatpush1.bf16.msra.mxu0 %v493
  %657 = vmatprep.subr.bf16.mxu0 0
  %658 = vmatpush1.bf16.msra.mxu0 %v494
  %659 = vmatprep.subr.bf16.mxu0 0
  %660 = vmatpush1.bf16.msra.mxu0 %v495
  %661 = vmatprep.subr.bf16.mxu0 0
  %662 = vmatpush1.bf16.msra.mxu0 %v496
  %663 = vmatprep.subr.bf16.mxu0 0
  %664 = vmatpush1.bf16.msra.mxu0 %v497
  %665 = vmatprep.subr.bf16.mxu0 0
  %666 = vmatpush1.bf16.msra.mxu0 %v498
  %667 = vmatprep.subr.bf16.mxu0 0
  %668 = vmatpush1.bf16.msra.mxu0 %v499
  %669 = vmatprep.mubr.bf16.mxu0 %v199
  %670 = vmatmul.mubr.bf16.gmra.mrb[0].mxu0 %v198
  %v671 = vpop.f32.mrb[0].mxu0
  %v672 = vadd.f32 %v631, %v671
  %v673 = vpop.f32.mrb[0].mxu0
  %v674 = vpop.f32.mrb[0].mxu0
  %v675 = vadd.f32 %v634, %v674
  %v676 = vpop.f32.mrb[0].mxu0
  %677 = vdwg.mxu0
  %678 = vmatprep.subr.bf16.mxu0 0
  %679 = vmatpush1.bf16.msra.mxu0 %v500
  %680 = vmatprep.subr.bf16.mxu0 0
  %681 = vmatpush1.bf16.msra.mxu0 %v501
  %682 = vmatprep.subr.bf16.mxu0 0
  %683 = vmatpush1.bf16.msra.mxu0 %v502
  %684 = vmatprep.subr.bf16.mxu0 0
  %685 = vmatpush1.bf16.msra.mxu0 %v503
  %686 = vmatprep.subr.bf16.mxu0 0
  %687 = vmatpush1.bf16.msra.mxu0 %v504
  %688 = vmatprep.subr.bf16.mxu0 0
  %689 = vmatpush1.bf16.msra.mxu0 %v505
  %690 = vmatprep.subr.bf16.mxu0 0
  %691 = vmatpush1.bf16.msra.mxu0 %v506
  %692 = vmatprep.subr.bf16.mxu0 0
  %693 = vmatpush1.bf16.msra.mxu0 %v507
  %694 = vmatprep.subr.bf16.mxu0 0
  %695 = vmatpush1.bf16.msra.mxu0 %v508
  %696 = vmatprep.subr.bf16.mxu0 0
  %697 = vmatpush1.bf16.msra.mxu0 %v509
  %698 = vmatprep.subr.bf16.mxu0 0
  %699 = vmatpush1.bf16.msra.mxu0 %v510
  %700 = vmatprep.subr.bf16.mxu0 0
  %701 = vmatpush1.bf16.msra.mxu0 %v511
  %702 = vmatprep.subr.bf16.mxu0 0
  %703 = vmatpush1.bf16.msra.mxu0 %v512
  %704 = vmatprep.subr.bf16.mxu0 0
  %705 = vmatpush1.bf16.msra.mxu0 %v513
  %706 = vmatprep.subr.bf16.mxu0 0
  %707 = vmatpush1.bf16.msra.mxu0 %v514
  %708 = vmatprep.subr.bf16.mxu0 0
  %709 = vmatpush1.bf16.msra.mxu0 %v515
  %710 = vmatprep.mubr.bf16.mxu0 %v201
  %711 = vmatmul.mubr.bf16.gmra.mrb[0].mxu0 %v200
  %v712 = vpop.f32.mrb[0].mxu0
  %v713 = vadd.f32 %v672, %v712
  %v714 = vpop.f32.mrb[0].mxu0
  %v715 = vpop.f32.mrb[0].mxu0
  %v716 = vadd.f32 %v675, %v715
  %v717 = vpop.f32.mrb[0].mxu0
  %718 = vdwg.mxu0
  %719 = vmatprep.subr.bf16.mxu0 0
  %720 = vmatpush1.bf16.msra.mxu0 %v516
  %721 = vmatprep.subr.bf16.mxu0 0
  %722 = vmatpush1.bf16.msra.mxu0 %v517
  %723 = vmatprep.subr.bf16.mxu0 0
  %724 = vmatpush1.bf16.msra.mxu0 %v518
  %725 = vmatprep.subr.bf16.mxu0 0
  %726 = vmatpush1.bf16.msra.mxu0 %v519
  %727 = vmatprep.subr.bf16.mxu0 0
  %728 = vmatpush1.bf16.msra.mxu0 %v520
  %729 = vmatprep.subr.bf16.mxu0 0
  %730 = vmatpush1.bf16.msra.mxu0 %v521
  %731 = vmatprep.subr.bf16.mxu0 0
  %732 = vmatpush1.bf16.msra.mxu0 %v522
  %733 = vmatprep.subr.bf16.mxu0 0
  %734 = vmatpush1.bf16.msra.mxu0 %v523
  %735 = vmatprep.subr.bf16.mxu0 0
  %736 = vmatpush1.bf16.msra.mxu0 %v524
  %737 = vmatprep.subr.bf16.mxu0 0
  %738 = vmatpush1.bf16.msra.mxu0 %v525
  %739 = vmatprep.subr.bf16.mxu0 0
  %740 = vmatpush1.bf16.msra.mxu0 %v526
  %741 = vmatprep.subr.bf16.mxu0 0
  %742 = vmatpush1.bf16.msra.mxu0 %v527
  %743 = vmatprep.subr.bf16.mxu0 0
  %744 = vmatpush1.bf16.msra.mxu0 %v528
  %745 = vmatprep.subr.bf16.mxu0 0
  %746 = vmatpush1.bf16.msra.mxu0 %v529
  %747 = vmatprep.subr.bf16.mxu0 0
  %748 = vmatpush1.bf16.msra.mxu0 %v530
  %749 = vmatprep.subr.bf16.mxu0 0
  %750 = vmatpush1.bf16.msra.mxu0 %v531
  %751 = vmatprep.mubr.bf16.mxu0 %v203
  %752 = vmatmul.mubr.bf16.gmra.mrb[0].mxu0 %v202
  %v753 = vpop.f32.mrb[0].mxu0
  %v754 = vadd.f32 %v713, %v753
  %v755 = vpop.f32.mrb[0].mxu0
  %v756 = vpop.f32.mrb[0].mxu0
  %v757 = vadd.f32 %v716, %v756
  %v758 = vpop.f32.mrb[0].mxu0
  %759 = vdwg.mxu0
  %v760 = vadd.f32 %v34, %v754
  %v761 = vadd.f32 %v35, %v757
  %762 = vst [vmem:[%s5] sm:$0xff] %v760
  %763 = vst [vmem:[%s5 + $0x8] sm:$0xff] %v761
  // Predicated region
  $region26: #{net_wrapper_forward.1} parent=0 // pred_check
    %p764 = pneg %p23
  $region27: #{net_wrapper_forward.1} parent=0 // pred_check_branch
    %766 = sbr.rel (%p764) target = $region29
  $region28: #{net_wrapper_forward.1} parent=0 // pred_region
    %v767 = vld [vmem:[%s5] sm:$0xff]
    %v768 = vld [vmem:[%s5 + $0x8] sm:$0xff]
    %v769 = vmax.f32 %v767, 0.0
    %v770 = vmax.f32 %v768, 0.0
    %771 = vst [vmem:[%s5] sm:$0xff] %v769
    %772 = vst [vmem:[%s5 + $0x8] sm:$0xff] %v770
    %v773 = vld [vmem:[%s4 + $0x1] sm:$0x1]
    %v774 = vld [vmem:[%s4 + $0x2] sm:$0x1]
    %v775 = vld [vmem:[%s4 + $0x3] sm:$0x1]
    %v776 = vld [vmem:[%s4 + $0x4] sm:$0x1]
    %v777 = vpack.c.bf16 %v770, %v769
    %v778 = vld [vmem:[%s2] sm:$0xf]
    %v779 = vld [vmem:[%s2 + $0x4] sm:$0xf]
    %v780 = vld [vmem:[%s2 + $0x8] sm:$0xf]
    %v781 = vld [vmem:[%s2 + $0xc] sm:$0xf]
    %v782 = vld [vmem:[%s2 + $0x10] sm:$0xf]
    %v783 = vld [vmem:[%s2 + $0x14] sm:$0xf]
    %v784 = vld [vmem:[%s2 + $0x18] sm:$0xf]
    %v785 = vld [vmem:[%s2 + $0x1c] sm:$0xf]
    %v786 = vld [vmem:[%s2 + $0x20] sm:$0xf]
    %v787 = vld [vmem:[%s2 + $0x24] sm:$0xf]
    %v788 = vld [vmem:[%s2 + $0x28] sm:$0xf]
    %v789 = vld [vmem:[%s2 + $0x2c] sm:$0xf]
    %v790 = vld [vmem:[%s2 + $0x30] sm:$0xf]
    %v791 = vld [vmem:[%s2 + $0x34] sm:$0xf]
    %v792 = vld [vmem:[%s2 + $0x38] sm:$0xf]
    %v793 = vld [vmem:[%s2 + $0x3c] sm:$0xf]
    %v794 = vlaneseq
    %v795 = vshrl.u32 %v794, 7
    %v796 = vsub.s32 0, %v795
    %v797 = vrot.slane %v773, %v796
    %v814 = vunpack.c.l.b16 %v778
    %v815 = vunpack.c.l.b16 %v779
    %v816 = vunpack.c.l.b16 %v780
    %v817 = vunpack.c.l.b16 %v781
    %v818 = vunpack.c.l.b16 %v782
    %v819 = vunpack.c.l.b16 %v783
    %v820 = vunpack.c.l.b16 %v784
    %v821 = vunpack.c.l.b16 %v785
    %v822 = vunpack.c.l.b16 %v786
    %v823 = vunpack.c.l.b16 %v787
    %v824 = vunpack.c.l.b16 %v788
    %v825 = vunpack.c.l.b16 %v789
    %v826 = vunpack.c.l.b16 %v790
    %v827 = vunpack.c.l.b16 %v791
    %v828 = vunpack.c.l.b16 %v792
    %v829 = vunpack.c.l.b16 %v793
    %v830 = vpack.c.b16 %v815, %v814
    %v831 = vpack.c.b16 %v817, %v816
    %v832 = vpack.c.b16 %v819, %v818
    %v833 = vpack.c.b16 %v821, %v820
    %v834 = vpack.c.b16 %v823, %v822
    %v835 = vpack.c.b16 %v825, %v824
    %v836 = vpack.c.b16 %v827, %v826
    %v837 = vpack.c.b16 %v829, %v828
    %846 = vmatprep.subr.bf16.mxu0 0
    %847 = vmatpush1.bf16.msra.mxu0 %v830
    %848 = vmatprep.subr.bf16.mxu0 0
    %849 = vmatpush1.bf16.msra.mxu0 %v831
    %850 = vmatprep.subr.bf16.mxu0 0
    %851 = vmatpush1.bf16.msra.mxu0 %v832
    %852 = vmatprep.subr.bf16.mxu0 0
    %853 = vmatpush1.bf16.msra.mxu0 %v833
    %854 = vmatprep.subr.bf16.mxu0 0
    %855 = vmatpush1.bf16.msra.mxu0 %v834
    %856 = vmatprep.subr.bf16.mxu0 0
    %857 = vmatpush1.bf16.msra.mxu0 %v835
    %858 = vmatprep.subr.bf16.mxu0 0
    %859 = vmatpush1.bf16.msra.mxu0 %v836
    %860 = vmatprep.subr.bf16.mxu0 0
    %861 = vmatpush1.bf16.msra.mxu0 %v837
    %862 = vmatprep.subr.bf16.mxu0 0
    %863 = vmatpush1.bf16.msra.mxu0 0
    %864 = vmatprep.subr.bf16.mxu0 0
    %865 = vmatpush1.bf16.msra.mxu0 0
    %866 = vmatprep.subr.bf16.mxu0 0
    %867 = vmatpush1.bf16.msra.mxu0 0
    %868 = vmatprep.subr.bf16.mxu0 0
    %869 = vmatpush1.bf16.msra.mxu0 0
    %870 = vmatprep.subr.bf16.mxu0 0
    %871 = vmatpush1.bf16.msra.mxu0 0
    %872 = vmatprep.subr.bf16.mxu0 0
    %873 = vmatpush1.bf16.msra.mxu0 0
    %874 = vmatprep.subr.bf16.mxu0 0
    %875 = vmatpush1.bf16.msra.mxu0 0
    %876 = vmatprep.subr.bf16.mxu0 0
    %877 = vmatpush1.bf16.msra.mxu0 0
    %878 = vmatprep.mubr.bf16.mxu0 0
    %879 = vmatmul.mubr.bf16.gmra.mrb[0].mxu0 %v777
    %v880 = vpop.f32.mrb[0].mxu0
    %v881 = vadd.f32 %v797, %v880
    %v882 = vpop.f32.mrb[0].mxu0
    %v883 = vpop.f32.mrb[0].mxu0
    %v884 = vadd.f32 %v797, %v883
    %v885 = vpop.f32.mrb[0].mxu0
    %886 = vdwg.mxu0
    %v887 = vlaneseq
    %v888 = vshrl.u32 %v887, 7
    %v889 = vadd.s32 %v888, 8
    %vm890 = vcmp.lt.s32.totalorder %v888, 2
    %vm891 = vcmp.lt.s32.totalorder %v889, 2
    %v892 = vsel %vm890, 1, 0
    %v893 = vsel %vm891, 1, 0
    %v894 = vcvt.s32.f32 %v892
    %v895 = vcvt.s32.f32 %v893
    %v896 = vmul.f32 %v881, %v894
    %v897 = vmul.f32 %v884, %v895
    %v898 = vadd.f32 %v896, %v897
    %v899 = vrot.slane %v898, 4
    %v900 = vadd.f32 %v898, %v899
    %v901 = vrot.slane %v900, 2
    %v902 = vadd.f32 %v900, %v901
    %v903 = vrot.slane %v902, 1
    %v904 = vadd.f32 %v902, %v903
    %v905 = vmul.f32 %v904, 0.5
    %v906 = vsub.f32 %v881, %v905
    %v907 = vsub.f32 %v884, %v905
    %v908 = vmul.f32 %v906, %v894
    %v909 = vmul.f32 %v907, %v895
    %v910 = vmul.f32 %v908, %v908
    %v911 = vmul.f32 %v909, %v909
    %v912 = vadd.f32 %v910, %v911
    %v913 = vrot.slane %v912, 4
    %v914 = vadd.f32 %v912, %v913
    %v915 = vrot.slane %v914, 2
    %v916 = vadd.f32 %v914, %v915
    %v917 = vrot.slane %v916, 1
    %v918 = vadd.f32 %v916, %v917
    %v919 = vmul.f32 %v918, 0.5
    %v920 = vadd.f32 %v919, 1e-05
    %v921 = vrsqrt.pop %v920
    %v922 = vmul.f32 %v774, %v921
    %v923 = vlaneseq
    %v924 = vshrl.u32 %v923, 7
    %v925 = vsub.s32 0, %v924
    %v926 = vrot.slane %v922, %v925
    %v927 = vmul.f32 %v906, %v926
    %v928 = vmul.f32 %v907, %v926
    %v929 = vlaneseq
    %v930 = vshrl.u32 %v929, 7
    %v931 = vsub.s32 0, %v930
    %v932 = vrot.slane %v775, %v931
    %v933 = vadd.f32 %v927, %v932
    %v934 = vadd.f32 %v928, %v932
    %v935 = vmax.f32 %v933, 0.0
    %v936 = vmax.f32 %v934, 0.0
    %v937 = vpack.c.bf16 %v936, %v935
    %v938 = vld [vmem:[%s3] sm:$0xf]
    %v939 = vld [vmem:[%s3 + $0x4] sm:$0xf]
    %v940 = vld [vmem:[%s3 + $0x8] sm:$0xf]
    %v941 = vld [vmem:[%s3 + $0xc] sm:$0xf]
    %v942 = vld [vmem:[%s3 + $0x10] sm:$0xf]
    %v943 = vld [vmem:[%s3 + $0x14] sm:$0xf]
    %v944 = vld [vmem:[%s3 + $0x18] sm:$0xf]
    %v945 = vld [vmem:[%s3 + $0x1c] sm:$0xf]
    %v946 = vld [vmem:[%s3 + $0x20] sm:$0xf]
    %v947 = vld [vmem:[%s3 + $0x24] sm:$0xf]
    %v948 = vld [vmem:[%s3 + $0x28] sm:$0xf]
    %v949 = vld [vmem:[%s3 + $0x2c] sm:$0xf]
    %v950 = vld [vmem:[%s3 + $0x30] sm:$0xf]
    %v951 = vld [vmem:[%s3 + $0x34] sm:$0xf]
    %v952 = vld [vmem:[%s3 + $0x38] sm:$0xf]
    %v953 = vld [vmem:[%s3 + $0x3c] sm:$0xf]
    %v954 = vlaneseq
    %v955 = vshrl.u32 %v954, 7
    %v956 = vsub.s32 0, %v955
    %v957 = vrot.slane %v776, %v956
    %v974 = vunpack.c.l.b16 %v938
    %v975 = vunpack.c.l.b16 %v939
    %v976 = vunpack.c.l.b16 %v940
    %v977 = vunpack.c.l.b16 %v941
    %v978 = vunpack.c.l.b16 %v942
    %v979 = vunpack.c.l.b16 %v943
    %v980 = vunpack.c.l.b16 %v944
    %v981 = vunpack.c.l.b16 %v945
    %v982 = vunpack.c.l.b16 %v946
    %v983 = vunpack.c.l.b16 %v947
    %v984 = vunpack.c.l.b16 %v948
    %v985 = vunpack.c.l.b16 %v949
    %v986 = vunpack.c.l.b16 %v950
    %v987 = vunpack.c.l.b16 %v951
    %v988 = vunpack.c.l.b16 %v952
    %v989 = vunpack.c.l.b16 %v953
    %v990 = vpack.c.b16 %v975, %v974
    %v991 = vpack.c.b16 %v977, %v976
    %v992 = vpack.c.b16 %v979, %v978
    %v993 = vpack.c.b16 %v981, %v980
    %v994 = vpack.c.b16 %v983, %v982
    %v995 = vpack.c.b16 %v985, %v984
    %v996 = vpack.c.b16 %v987, %v986
    %v997 = vpack.c.b16 %v989, %v988
    %1006 = vmatprep.subr.bf16.mxu0 0
    %1007 = vmatpush1.bf16.msra.mxu0 %v990
    %1008 = vmatprep.subr.bf16.mxu0 0
    %1009 = vmatpush1.bf16.msra.mxu0 %v991
    %1010 = vmatprep.subr.bf16.mxu0 0
    %1011 = vmatpush1.bf16.msra.mxu0 %v992
    %1012 = vmatprep.subr.bf16.mxu0 0
    %1013 = vmatpush1.bf16.msra.mxu0 %v993
    %1014 = vmatprep.subr.bf16.mxu0 0
    %1015 = vmatpush1.bf16.msra.mxu0 %v994
    %1016 = vmatprep.subr.bf16.mxu0 0
    %1017 = vmatpush1.bf16.msra.mxu0 %v995
    %1018 = vmatprep.subr.bf16.mxu0 0
    %1019 = vmatpush1.bf16.msra.mxu0 %v996
    %1020 = vmatprep.subr.bf16.mxu0 0
    %1021 = vmatpush1.bf16.msra.mxu0 %v997
    %1022 = vmatprep.subr.bf16.mxu0 0
    %1023 = vmatpush1.bf16.msra.mxu0 0
    %1024 = vmatprep.subr.bf16.mxu0 0
    %1025 = vmatpush1.bf16.msra.mxu0 0
    %1026 = vmatprep.subr.bf16.mxu0 0
    %1027 = vmatpush1.bf16.msra.mxu0 0
    %1028 = vmatprep.subr.bf16.mxu0 0
    %1029 = vmatpush1.bf16.msra.mxu0 0
    %1030 = vmatprep.subr.bf16.mxu0 0
    %1031 = vmatpush1.bf16.msra.mxu0 0
    %1032 = vmatprep.subr.bf16.mxu0 0
    %1033 = vmatpush1.bf16.msra.mxu0 0
    %1034 = vmatprep.subr.bf16.mxu0 0
    %1035 = vmatpush1.bf16.msra.mxu0 0
    %1036 = vmatprep.subr.bf16.mxu0 0
    %1037 = vmatpush1.bf16.msra.mxu0 0
    %1038 = vmatprep.mubr.bf16.mxu0 0
    %1039 = vmatmul.mubr.bf16.gmra.mrb[0].mxu0 %v937
    %v1040 = vpop.f32.mrb[0].mxu0
    %v1041 = vadd.f32 %v957, %v1040
    %v1042 = vpop.f32.mrb[0].mxu0
    %v1043 = vpop.f32.mrb[0].mxu0
    %v1044 = vadd.f32 %v957, %v1043
    %v1045 = vpop.f32.mrb[0].mxu0
    %1046 = vdwg.mxu0
    %1047 = vst [vmem:[%s6] sm:$0xff] %v1041
    %1048 = vst [vmem:[%s6 + $0x8] sm:$0xff] %v1044
  $region29: #{net_wrapper_forward.1} parent=0 // pred_fallthru
    _
  // Predicated region
  $region30: #{net_wrapper_forward.1} parent=0 // pred_check
    _
  $region31: #{net_wrapper_forward.1} parent=0 // pred_check_branch
    %1050 = sbr.rel (0) target = $region33
  $region32: #{net_wrapper_forward.1} parent=0 // pred_region
    _
  $region33: #{net_wrapper_forward.1} parent=0 // pred_fallthru
    _
  // Predicated region
  $region34: #{net_wrapper_forward.1} parent=0 // pred_check
    _
  $region35: #{net_wrapper_forward.1} parent=0 // pred_check_branch
    %1052 = sbr.rel (0) target = $region37
  $region36: #{net_wrapper_forward.1} parent=0 // pred_region
    _
  $region37: #{net_wrapper_forward.1} parent=0 // pred_fallthru
    _
  // Predicated region
  $region38: #{net_wrapper_forward.1} parent=0 // pred_check
    _
  $region39: #{net_wrapper_forward.1} parent=0 // pred_check_branch
    %1054 = sbr.rel (0) target = $region41
  $region40: #{net_wrapper_forward.1} parent=0 // pred_region
    _
  $region41: #{net_wrapper_forward.1} parent=0 // pred_fallthru
    _
  // Predicated region
  $region42: #{net_wrapper_forward.1} parent=0 // pred_check
    _
  $region43: #{net_wrapper_forward.1} parent=0 // pred_check_branch
    %1056 = sbr.rel (0) target = $region45
  $region44: #{net_wrapper_forward.1} parent=0 // pred_region
    _
  $region45: #{net_wrapper_forward.1} parent=0 // pred_fallthru
    _

</llo_original>
